<compile_context>
chip_gen: v5e
topology: v5e:2x2
jax: 0.10.0
libtpu: 0.0.40
codegen_flags: <defaults>
</compile_context>

<pallas_src>
import math
from functools import partial

import jax
import jax.numpy as jnp
import numpy as np
from jax.experimental import pallas as pl
from jax.experimental.pallas import tpu as pltpu

EPS = 1e-5  # nn.BatchNorm2d default


# ---------------------------------------------------------------------------
# Fused kernel
# ---------------------------------------------------------------------------
def residual_block_kernel(x_ref, m1_ref, g1_ref, be1_ref, m2_ref, g2_ref,
                          be2_ref, alpha_ref, y_ref, xp_ref, *, C):
    """x_ref/y_ref: (H, N*W*C) lane-dense slabs (batch folded into lanes).
    m*_ref: (3*N*W*C, N*W*C) block-banded conv weights (ky stacked along K,
    kx shifts + channel mixing + W-edge padding + per-sample block-diagonal
    all folded in host-side).  g*/be*: (1, N*W*C) gamma/beta tiled over (N,W).
    alpha_ref: (1,) PReLU scalar in SMEM.
    xp_ref: VMEM scratch (H+2, N*W*C) holding the H-padded activation."""
    H, NWC = x_ref.shape
    inv_cnt = 1.0 / float(H * (NWC // C))        # BatchNorm averages over N*H*W

    x = x_ref[...]                               # (H, N*W*C)

    # Zero only the two padding border rows; the interior is overwritten below.
    zrow = jnp.zeros((1, NWC), jnp.float32)
    xp_ref[0:1, :] = zrow
    xp_ref[H + 1:H + 2, :] = zrow

    def conv(center, m_ref):
        # Write the (unpadded) activation into the scratch interior, then run
        # the whole 3x3 conv as ONE matmul with K = 3*N*W*C: row h of the LHS
        # is [padded row h | padded row h+1 | padded row h+2].  The center
        # window is exactly `center`, so it is used directly (no reload).
        xp_ref[1:H + 1, :] = center
        lhs = jnp.concatenate(
            [xp_ref[0:H, :], center, xp_ref[2:H + 2, :]], axis=1)  # (H, 3*NWC)
        return jnp.dot(lhs, m_ref[...], preferred_element_type=jnp.float32)

    def batchnorm(h, g_ref, be_ref):
        # Single-pass batch statistics (training-mode BN, biased variance).
        # Same-channel lanes (stride C) are pooled with log2(N*W) roll+add
        # steps on the XLU -- no pool weight matrix, no tiny MXU matmuls.
        stats = jnp.concatenate(
            [jnp.sum(h, axis=0, keepdims=True),
             jnp.sum(h * h, axis=0, keepdims=True)], axis=0)       # (2, NWC)
        shift = C
        while shift < NWC:                       # static trace-time loop
            stats = stats + pltpu.roll(stats, shift, axis=1)
            shift *= 2
        mean = stats[0:1, :] * inv_cnt
        var = stats[1:2, :] * inv_cnt - mean * mean
        return (h - mean) * jax.lax.rsqrt(var + EPS) * g_ref[...] + be_ref[...]

    h = conv(x, m1_ref)                          # conv1 (bias absorbed by bn1)
    h = batchnorm(h, g1_ref, be1_ref)            # bn1
    alpha = alpha_ref[0]                         # PReLU scalar from SMEM
    h = jnp.where(h > 0.0, h, alpha * h)         # PReLU (single shared param)

    h = conv(h, m2_ref)                          # conv2 (bias absorbed by bn2)
    h = batchnorm(h, g2_ref, be2_ref)            # bn2

    y_ref[...] = x + h                           # residual add, full-lane store


# ---------------------------------------------------------------------------
# Host-side parameter preparation (done once, outside jit)
# ---------------------------------------------------------------------------
def prepare_params(params, N, W):
    """Turn PyTorch-layout parameters into the kernel's lane-dense forms."""
    C = params["w1"].shape[0]
    WC = W * C
    NWC = N * WC

    def band(w_pt):
        # torch (Cout, Cin, 3, 3) -> (3*N*W*C, N*W*C) block-banded weight:
        #   * kx shifts + channel mixing + W-edge zero padding folded in,
        #   * the 3 ky taps stacked along K,
        #   * block-diagonal over the N samples folded into the lane axis.
        w = np.asarray(w_pt, np.float32)
        B = np.zeros((3, WC, WC), np.float32)
        for ky in range(3):
            for kx in range(3):
                blk = w[:, :, ky, kx].T                         # (c_in, c_out)
                for iw_out in range(W):
                    iw_in = iw_out + kx - 1
                    if 0 <= iw_in < W:                          # fold W padding
                        B[ky, iw_in * C:(iw_in + 1) * C,
                              iw_out * C:(iw_out + 1) * C] = blk
        M = np.zeros((3, NWC, NWC), np.float32)
        for n in range(N):
            M[:, n * WC:(n + 1) * WC, n * WC:(n + 1) * WC] = B  # per-sample
        return jnp.asarray(M.reshape(3 * NWC, NWC))

    def lane_tile(v):                                           # (C,) -> (1, NWC)
        return jnp.tile(jnp.asarray(v, jnp.float32).reshape(1, C), (1, N * W))

    return {
        "m1": band(params["w1"]), "m2": band(params["w2"]),
        "g1": lane_tile(params["g1"]), "be1": lane_tile(params["be1"]),
        "g2": lane_tile(params["g2"]), "be2": lane_tile(params["be2"]),
        "alpha": jnp.asarray(params["alpha"], jnp.float32).reshape(1,),
        # conv biases b1/b2 intentionally dropped: exactly absorbed by BN mean.
    }


# ---------------------------------------------------------------------------
# Public wrapper (NCHW in / NCHW out, like the PyTorch module)
# ---------------------------------------------------------------------------
def residual_block(x_nchw, prep):
    N, C, H, W = x_nchw.shape
    NWC = N * W * C
    # NCHW -> (H, N*W*C): lane axis carries (n, w, c) -> 128 full lanes here.
    x = jnp.transpose(x_nchw.astype(jnp.float32), (2, 0, 3, 1)).reshape(H, NWC)

    vmem = pl.BlockSpec(memory_space=pltpu.MemorySpace.VMEM)
    smem = pl.BlockSpec(memory_space=pltpu.MemorySpace.SMEM)
    y = pl.pallas_call(
        partial(residual_block_kernel, C=C),
        out_shape=jax.ShapeDtypeStruct((H, NWC), jnp.float32),
        in_specs=[vmem, vmem, vmem, vmem, vmem, vmem, vmem, smem],
        out_specs=vmem,
        scratch_shapes=[pltpu.VMEM((H + 2, NWC), jnp.float32)],
    )(x, prep["m1"], prep["g1"], prep["be1"],
      prep["m2"], prep["g2"], prep["be2"], prep["alpha"])

    return jnp.transpose(y.reshape(H, N, W, C), (1, 3, 0, 2))


# ---------------------------------------------------------------------------
# Pure-JAX reference (correctness check only; keeps the conv biases)
# ---------------------------------------------------------------------------
def reference_forward(x, p):
    def conv(h, w, b):
        out = jax.lax.conv_general_dilated(
            h, w, window_strides=(1, 1), padding=[(1, 1), (1, 1)],
            dimension_numbers=("NCHW", "OIHW", "NCHW"))
        return out + b.reshape(1, -1, 1, 1)

    def bn(h, g, be):
        m = jnp.mean(h, axis=(0, 2, 3), keepdims=True)
        v = jnp.mean((h - m) ** 2, axis=(0, 2, 3), keepdims=True)   # biased
        return (h - m) * jax.lax.rsqrt(v + EPS) * g.reshape(1, -1, 1, 1) \
            + be.reshape(1, -1, 1, 1)

    h = bn(conv(x, p["w1"], p["b1"]), p["g1"], p["be1"])
    h = jnp.where(h > 0, h, p["alpha"] * h)
    h = bn(conv(h, p["w2"], p["b2"]), p["g2"], p["be2"])
    return x + h


def make_params(key, C):
    ks = jax.random.split(key, 8)
    std = math.sqrt(2.0 / (C * 9))
    return {
        "w1": jax.random.normal(ks[0], (C, C, 3, 3), jnp.float32) * std,
        "b1": 0.05 * jax.random.normal(ks[1], (C,), jnp.float32),
        "g1": 1.0 + 0.1 * jax.random.normal(ks[2], (C,), jnp.float32),
        "be1": 0.1 * jax.random.normal(ks[3], (C,), jnp.float32),
        "alpha": jnp.float32(0.25),                      # nn.PReLU() default
        "w2": jax.random.normal(ks[4], (C, C, 3, 3), jnp.float32) * std,
        "b2": 0.05 * jax.random.normal(ks[5], (C,), jnp.float32),
        "g2": 1.0 + 0.1 * jax.random.normal(ks[6], (C,), jnp.float32),
        "be2": 0.1 * jax.random.normal(ks[7], (C,), jnp.float32),
    }


if __name__ == "__main__":
    N, C, H, W = 2, 4, 16, 16
    key = jax.random.PRNGKey(0)
    kx, kp = jax.random.split(key)
    x = jax.random.normal(kx, (N, C, H, W), jnp.float32)      # NCHW like PyTorch
    params = make_params(kp, C)
    prep = prepare_params(params, N, W)                       # host-side, once

    fwd = jax.jit(lambda x: residual_block(x, prep))
    y = jax.block_until_ready(fwd(x))

    y_ref = jax.block_until_ready(reference_forward(x, params))
    np.testing.assert_allclose(np.asarray(y), np.asarray(y_ref),
                               atol=1e-3, rtol=1e-3)
    assert y.shape == (N, C, H, W)
    print("KERNEL_OK")
</pallas_src>

<mosaic_0001>
module attributes {stable_mosaic.version = 11 : i64} {
  func.func @residual_block_kernel(%arg0: memref<16x128xf32, #tpu.memory_space<vmem>>, %arg1: memref<384x128xf32, #tpu.memory_space<vmem>>, %arg2: memref<1x128xf32, #tpu.memory_space<vmem>>, %arg3: memref<1x128xf32, #tpu.memory_space<vmem>>, %arg4: memref<384x128xf32, #tpu.memory_space<vmem>>, %arg5: memref<1x128xf32, #tpu.memory_space<vmem>>, %arg6: memref<1x128xf32, #tpu.memory_space<vmem>>, %arg7: memref<1xf32, #tpu.memory_space<smem>>, %arg8: memref<16x128xf32, #tpu.memory_space<vmem>>, %arg9: memref<18x128xf32, #tpu.memory_space<vmem>>) attributes {dimension_semantics = [], scalar_prefetch = 0 : i64, scratch_operands = 1 : i64, tpu.core_type = #tpu.core_type<tc>} {
    %c0 = arith.constant 0 : index
    %c0_0 = arith.constant 0 : index
    %0 = vector.load %arg0[%c0, %c0_0] : memref<16x128xf32, #tpu.memory_space<vmem>>, vector<16x128xf32>
    %cst = arith.constant 0.000000e+00 : f32
    %1 = vector.broadcast %cst : f32 to vector<1x128xf32>
    %c0_1 = arith.constant 0 : index
    %c0_2 = arith.constant 0 : index
    %2 = vector.load %arg9[%c0_1, %c0_2] : memref<18x128xf32, #tpu.memory_space<vmem>>, vector<1x128xf32>
    tpu.vector_store %arg9[%c0_1, %c0_2], %1 {strides = array<i32>} : memref<18x128xf32, #tpu.memory_space<vmem>>, vector<1x128xf32>,
    %c17 = arith.constant 17 : index
    %c0_3 = arith.constant 0 : index
    %3 = vector.load %arg9[%c17, %c0_3] : memref<18x128xf32, #tpu.memory_space<vmem>>, vector<1x128xf32>
    tpu.vector_store %arg9[%c17, %c0_3], %1 {strides = array<i32>} : memref<18x128xf32, #tpu.memory_space<vmem>>, vector<1x128xf32>,
    %c1 = arith.constant 1 : index
    %c0_4 = arith.constant 0 : index
    %4 = vector.load %arg9[%c1, %c0_4] : memref<18x128xf32, #tpu.memory_space<vmem>>, vector<16x128xf32>
    tpu.vector_store %arg9[%c1, %c0_4], %0 {strides = array<i32>} : memref<18x128xf32, #tpu.memory_space<vmem>>, vector<16x128xf32>,
    %c0_5 = arith.constant 0 : index
    %c0_6 = arith.constant 0 : index
    %5 = vector.load %arg9[%c0_5, %c0_6] : memref<18x128xf32, #tpu.memory_space<vmem>>, vector<16x128xf32>
    %c2 = arith.constant 2 : index
    %c0_7 = arith.constant 0 : index
    %6 = vector.load %arg9[%c2, %c0_7] : memref<18x128xf32, #tpu.memory_space<vmem>>, vector<16x128xf32>
    %7 = tpu.concatenate %5, %0, %6 in 1 : vector<16x128xf32>, vector<16x128xf32>, vector<16x128xf32> -> vector<16x384xf32>
    %c0_8 = arith.constant 0 : index
    %c0_9 = arith.constant 0 : index
    %8 = vector.load %arg1[%c0_8, %c0_9] : memref<384x128xf32, #tpu.memory_space<vmem>>, vector<384x128xf32>
    %cst_10 = arith.constant dense<0.000000e+00> : vector<16x128xf32>
    %9 = tpu.matmul %7, %8, %cst_10 {dimension_numbers = #tpu.dot_dimension_numbers<[1], [0], [0], [1], [0, 0, 1, 1], [], []>} : vector<16x384xf32>, vector<384x128xf32>, vector<16x128xf32> -> vector<16x128xf32>
    %cst_11 = arith.constant dense<0.000000e+00> : vector<128xf32>
    %10 = vector.multi_reduction <add>, %9, %cst_11 [0] : vector<16x128xf32> to vector<128xf32>
    %11 = vector.shape_cast %10 : vector<128xf32> to vector<1x128xf32>
    %12 = arith.mulf %9, %9 : vector<16x128xf32>
    %cst_12 = arith.constant dense<0.000000e+00> : vector<128xf32>
    %13 = vector.multi_reduction <add>, %12, %cst_12 [0] : vector<16x128xf32> to vector<128xf32>
    %14 = vector.shape_cast %13 : vector<128xf32> to vector<1x128xf32>
    %15 = tpu.concatenate %11, %14 in 0 : vector<1x128xf32>, vector<1x128xf32> -> vector<2x128xf32>
    %c4_i32 = arith.constant 4 : i32
    %16 = tpu.dynamic_rotate %15 by %c4_i32 dim 1 : vector<2x128xf32>, i32 -> vector<2x128xf32>
    %17 = arith.addf %15, %16 : vector<2x128xf32>
    %c8_i32 = arith.constant 8 : i32
    %18 = tpu.dynamic_rotate %17 by %c8_i32 dim 1 : vector<2x128xf32>, i32 -> vector<2x128xf32>
    %19 = arith.addf %17, %18 : vector<2x128xf32>
    %c16_i32 = arith.constant 16 : i32
    %20 = tpu.dynamic_rotate %19 by %c16_i32 dim 1 : vector<2x128xf32>, i32 -> vector<2x128xf32>
    %21 = arith.addf %19, %20 : vector<2x128xf32>
    %c32_i32 = arith.constant 32 : i32
    %22 = tpu.dynamic_rotate %21 by %c32_i32 dim 1 : vector<2x128xf32>, i32 -> vector<2x128xf32>
    %23 = arith.addf %21, %22 : vector<2x128xf32>
    %c64_i32 = arith.constant 64 : i32
    %24 = tpu.dynamic_rotate %23 by %c64_i32 dim 1 : vector<2x128xf32>, i32 -> vector<2x128xf32>
    %25 = arith.addf %23, %24 : vector<2x128xf32>
    %26 = vector.extract_strided_slice %25 {offsets = [0, 0], sizes = [1, 128], strides = [1, 1]} : vector<2x128xf32> to vector<1x128xf32>
    %cst_13 = arith.constant 0.001953125 : f32
    %27 = vector.broadcast %cst_13 : f32 to vector<1x128xf32>
    %28 = arith.mulf %26, %27 : vector<1x128xf32>
    %29 = vector.extract_strided_slice %25 {offsets = [1, 0], sizes = [1, 128], strides = [1, 1]} : vector<2x128xf32> to vector<1x128xf32>
    %cst_14 = arith.constant 0.001953125 : f32
    %30 = vector.broadcast %cst_14 : f32 to vector<1x128xf32>
    %31 = arith.mulf %29, %30 : vector<1x128xf32>
    %32 = arith.mulf %28, %28 : vector<1x128xf32>
    %33 = arith.subf %31, %32 : vector<1x128xf32>
    %34 = vector.broadcast %28 : vector<1x128xf32> to vector<16x128xf32>
    %35 = arith.subf %9, %34 : vector<16x128xf32>
    %cst_15 = arith.constant 9.99999974E-6 : f32
    %36 = vector.broadcast %cst_15 : f32 to vector<1x128xf32>
    %37 = arith.addf %33, %36 : vector<1x128xf32>
    %38 = math.rsqrt %37 : vector<1x128xf32>
    %39 = vector.broadcast %38 : vector<1x128xf32> to vector<16x128xf32>
    %40 = arith.mulf %35, %39 : vector<16x128xf32>
    %c0_16 = arith.constant 0 : index
    %c0_17 = arith.constant 0 : index
    %41 = vector.load %arg2[%c0_16, %c0_17] : memref<1x128xf32, #tpu.memory_space<vmem>>, vector<1x128xf32>
    %42 = vector.broadcast %41 : vector<1x128xf32> to vector<16x128xf32>
    %43 = arith.mulf %40, %42 : vector<16x128xf32>
    %c0_18 = arith.constant 0 : index
    %c0_19 = arith.constant 0 : index
    %44 = vector.load %arg3[%c0_18, %c0_19] : memref<1x128xf32, #tpu.memory_space<vmem>>, vector<1x128xf32>
    %45 = vector.broadcast %44 : vector<1x128xf32> to vector<16x128xf32>
    %46 = arith.addf %43, %45 : vector<16x128xf32>
    %c0_20 = arith.constant 0 : index
    %47 = memref.load %arg7[%c0_20] : memref<1xf32, #tpu.memory_space<smem>>
    %cst_21 = arith.constant 0.000000e+00 : f32
    %48 = vector.broadcast %cst_21 : f32 to vector<16x128xf32>
    %49 = arith.cmpf ogt, %46, %48 : vector<16x128xf32>
    %50 = vector.broadcast %47 : f32 to vector<16x128xf32>
    %51 = arith.mulf %50, %46 : vector<16x128xf32>
    %52 = arith.select %49, %46, %51 : vector<16x128xi1>, vector<16x128xf32>
    %c1_22 = arith.constant 1 : index
    %c0_23 = arith.constant 0 : index
    %53 = vector.load %arg9[%c1_22, %c0_23] : memref<18x128xf32, #tpu.memory_space<vmem>>, vector<16x128xf32>
    tpu.vector_store %arg9[%c1_22, %c0_23], %52 {strides = array<i32>} : memref<18x128xf32, #tpu.memory_space<vmem>>, vector<16x128xf32>,
    %c0_24 = arith.constant 0 : index
    %c0_25 = arith.constant 0 : index
    %54 = vector.load %arg9[%c0_24, %c0_25] : memref<18x128xf32, #tpu.memory_space<vmem>>, vector<16x128xf32>
    %c2_26 = arith.constant 2 : index
    %c0_27 = arith.constant 0 : index
    %55 = vector.load %arg9[%c2_26, %c0_27] : memref<18x128xf32, #tpu.memory_space<vmem>>, vector<16x128xf32>
    %56 = tpu.concatenate %54, %52, %55 in 1 : vector<16x128xf32>, vector<16x128xf32>, vector<16x128xf32> -> vector<16x384xf32>
    %c0_28 = arith.constant 0 : index
    %c0_29 = arith.constant 0 : index
    %57 = vector.load %arg4[%c0_28, %c0_29] : memref<384x128xf32, #tpu.memory_space<vmem>>, vector<384x128xf32>
    %cst_30 = arith.constant dense<0.000000e+00> : vector<16x128xf32>
    %58 = tpu.matmul %56, %57, %cst_30 {dimension_numbers = #tpu.dot_dimension_numbers<[1], [0], [0], [1], [0, 0, 1, 1], [], []>} : vector<16x384xf32>, vector<384x128xf32>, vector<16x128xf32> -> vector<16x128xf32>
    %cst_31 = arith.constant dense<0.000000e+00> : vector<128xf32>
    %59 = vector.multi_reduction <add>, %58, %cst_31 [0] : vector<16x128xf32> to vector<128xf32>
    %60 = vector.shape_cast %59 : vector<128xf32> to vector<1x128xf32>
    %61 = arith.mulf %58, %58 : vector<16x128xf32>
    %cst_32 = arith.constant dense<0.000000e+00> : vector<128xf32>
    %62 = vector.multi_reduction <add>, %61, %cst_32 [0] : vector<16x128xf32> to vector<128xf32>
    %63 = vector.shape_cast %62 : vector<128xf32> to vector<1x128xf32>
    %64 = tpu.concatenate %60, %63 in 0 : vector<1x128xf32>, vector<1x128xf32> -> vector<2x128xf32>
    %c4_i32_33 = arith.constant 4 : i32
    %65 = tpu.dynamic_rotate %64 by %c4_i32_33 dim 1 : vector<2x128xf32>, i32 -> vector<2x128xf32>
    %66 = arith.addf %64, %65 : vector<2x128xf32>
    %c8_i32_34 = arith.constant 8 : i32
    %67 = tpu.dynamic_rotate %66 by %c8_i32_34 dim 1 : vector<2x128xf32>, i32 -> vector<2x128xf32>
    %68 = arith.addf %66, %67 : vector<2x128xf32>
    %c16_i32_35 = arith.constant 16 : i32
    %69 = tpu.dynamic_rotate %68 by %c16_i32_35 dim 1 : vector<2x128xf32>, i32 -> vector<2x128xf32>
    %70 = arith.addf %68, %69 : vector<2x128xf32>
    %c32_i32_36 = arith.constant 32 : i32
    %71 = tpu.dynamic_rotate %70 by %c32_i32_36 dim 1 : vector<2x128xf32>, i32 -> vector<2x128xf32>
    %72 = arith.addf %70, %71 : vector<2x128xf32>
    %c64_i32_37 = arith.constant 64 : i32
    %73 = tpu.dynamic_rotate %72 by %c64_i32_37 dim 1 : vector<2x128xf32>, i32 -> vector<2x128xf32>
    %74 = arith.addf %72, %73 : vector<2x128xf32>
    %75 = vector.extract_strided_slice %74 {offsets = [0, 0], sizes = [1, 128], strides = [1, 1]} : vector<2x128xf32> to vector<1x128xf32>
    %cst_38 = arith.constant 0.001953125 : f32
    %76 = vector.broadcast %cst_38 : f32 to vector<1x128xf32>
    %77 = arith.mulf %75, %76 : vector<1x128xf32>
    %78 = vector.extract_strided_slice %74 {offsets = [1, 0], sizes = [1, 128], strides = [1, 1]} : vector<2x128xf32> to vector<1x128xf32>
    %cst_39 = arith.constant 0.001953125 : f32
    %79 = vector.broadcast %cst_39 : f32 to vector<1x128xf32>
    %80 = arith.mulf %78, %79 : vector<1x128xf32>
    %81 = arith.mulf %77, %77 : vector<1x128xf32>
    %82 = arith.subf %80, %81 : vector<1x128xf32>
    %83 = vector.broadcast %77 : vector<1x128xf32> to vector<16x128xf32>
    %84 = arith.subf %58, %83 : vector<16x128xf32>
    %cst_40 = arith.constant 9.99999974E-6 : f32
    %85 = vector.broadcast %cst_40 : f32 to vector<1x128xf32>
    %86 = arith.addf %82, %85 : vector<1x128xf32>
    %87 = math.rsqrt %86 : vector<1x128xf32>
    %88 = vector.broadcast %87 : vector<1x128xf32> to vector<16x128xf32>
    %89 = arith.mulf %84, %88 : vector<16x128xf32>
    %c0_41 = arith.constant 0 : index
    %c0_42 = arith.constant 0 : index
    %90 = vector.load %arg5[%c0_41, %c0_42] : memref<1x128xf32, #tpu.memory_space<vmem>>, vector<1x128xf32>
    %91 = vector.broadcast %90 : vector<1x128xf32> to vector<16x128xf32>
    %92 = arith.mulf %89, %91 : vector<16x128xf32>
    %c0_43 = arith.constant 0 : index
    %c0_44 = arith.constant 0 : index
    %93 = vector.load %arg6[%c0_43, %c0_44] : memref<1x128xf32, #tpu.memory_space<vmem>>, vector<1x128xf32>
    %94 = vector.broadcast %93 : vector<1x128xf32> to vector<16x128xf32>
    %95 = arith.addf %92, %94 : vector<16x128xf32>
    %96 = arith.addf %0, %95 : vector<16x128xf32>
    %c0_45 = arith.constant 0 : index
    %c0_46 = arith.constant 0 : index
    %97 = vector.load %arg8[%c0_45, %c0_46] : memref<16x128xf32, #tpu.memory_space<vmem>>, vector<16x128xf32>
    tpu.vector_store %arg8[%c0_45, %c0_46], %96 {strides = array<i32>} : memref<16x128xf32, #tpu.memory_space<vmem>>, vector<16x128xf32>,
    return
  }
}

</mosaic_0001>

<llo_original>
// kernel: _lambda_.1
$region0: #{_lambda_.1}
  #allocation0 [shape = 'u32[]', space=smem, size = 0x4, offset = 0x4, fixed_abs, tag = 'smem constant byte address 0x4 - core index']
  #allocation1 [shape = 'u32[72,128]{1,0:T(1,128)}', space=vmem, size = 0x9000, scoped, tag = 'internal scratch']
  #allocation2 [shape = 'f32[18,128]{1,0:T(8,128)}', space=vmem, size = 0x3000, scoped, tag = 'scratch operand']
  #allocation3 [shape = 'f32[1]{0:T(128)S(6)}', space=smem, size = 0x200, scoped, tag = 'scoped memory for _lambda_.1']
  %s0 = inlined_call_operand.vmem [shape: f32[16,128], index: 0, kind: input, shape index: {}]
  %s1 = inlined_call_operand.hbm [shape: f32[384,128], index: 1, kind: input, shape index: {}]
  %s2 = inlined_call_operand.vmem [shape: f32[1,128], index: 2, kind: input, shape index: {}]
  %s3 = inlined_call_operand.vmem [shape: f32[1,128], index: 3, kind: input, shape index: {}]
  %s4 = inlined_call_operand.vmem [shape: f32[384,128], index: 4, kind: input, shape index: {}]
  %s5 = inlined_call_operand.vmem [shape: f32[1,128], index: 5, kind: input, shape index: {}]
  %s6 = inlined_call_operand.vmem [shape: f32[1,128], index: 6, kind: input, shape index: {}]
  %s7 = inlined_call_operand.<no memory space> [shape: f32[1], index: 7, kind: input, shape index: {}]
  %s8 = inlined_call_operand.vmem [shape: f32[16,128], index: 8, kind: output, shape index: {}]
  %s9 = sld [smem:[#allocation0]]
  $region46: #{_lambda_.1} parent=0
    _
  %s11 = ssub.s32 1, %s9
  %s12 = scalar_select 0, %s11, %s9
  %13 = sst [smem:[#allocation3]] %s7
  $region1: #{_lambda_.1} parent=0
    #allocation4 [shape = 'u8[196608]{0}', space=vmem, size = 0x30000, scoped, tag = 'input window, operand 1, single buffered']
    #allocation5 [shape = 's32[1]{0}', space=sflag, size = 0x4, scoped, tag = 'scoped memory for _lambda_.1']
    %14 = vsyncpa [#allocation5], 0
    // Predicated region
    $region2: #{_lambda_.1} parent=1 // pred_check
      _
    $region3: #{_lambda_.1} parent=1 // pred_check_branch
      %16 = sbr.rel (0) target = $region5
    $region4: #{_lambda_.1} parent=1 // pred_region
      _
    $region5: #{_lambda_.1} parent=1 // pred_fallthru
      _
    // Predicated region
    $region6: #{_lambda_.1} parent=1 // pred_check
      _
    $region7: #{_lambda_.1} parent=1 // pred_check_branch
      %18 = sbr.rel (0) target = $region9
    $region8: #{_lambda_.1} parent=1 // pred_region
      %20 = vsyncadd [#allocation5], 0
      %s21 = sshll.u32 %s1, 4
      %s22 = int_to_ptr.hbm [resolvable:$true] %s21
      %s23 = sshll.u32 [#allocation4], 4
      %s24 = int_to_ptr.vmem [resolvable:$true] %s23
      %29 = dma.hbm_to_vmem [thread:$0]  %s22, 6144, %s24, [#allocation5], 128, 128, 8
    $region9: #{_lambda_.1} parent=1 // pred_fallthru
      _
    // Predicated region
    $region10: #{_lambda_.1} parent=1 // pred_check
      _
    $region11: #{_lambda_.1} parent=1 // pred_check_branch
      %31 = sbr.rel (0) target = $region13
    $region12: #{_lambda_.1} parent=1 // pred_region
      _
    $region13: #{_lambda_.1} parent=1 // pred_fallthru
      _
    // Predicated region
    $region14: #{_lambda_.1} parent=1 // pred_check
      _
    $region15: #{_lambda_.1} parent=1 // pred_check_branch
      %33 = sbr.rel (0) target = $region17
    $region16: #{_lambda_.1} parent=1 // pred_region
      _
    $region17: #{_lambda_.1} parent=1 // pred_fallthru
      _
    // Predicated region
    $region18: #{_lambda_.1} parent=1 // pred_check
      _
    $region19: #{_lambda_.1} parent=1 // pred_check_branch
      %35 = sbr.rel (0) target = $region21
    $region20: #{_lambda_.1} parent=1 // pred_region
      _
    $region21: #{_lambda_.1} parent=1 // pred_fallthru
      _
    // Predicated region
    $region22: #{_lambda_.1} parent=1 // pred_check
      _
    $region23: #{_lambda_.1} parent=1 // pred_check_branch
      %37 = sbr.rel (0) target = $region25
    $region24: #{_lambda_.1} parent=1 // pred_region
      _
    $region25: #{_lambda_.1} parent=1 // pred_fallthru
      _
    // Predicated region
    $region26: #{_lambda_.1} parent=1 // pred_check
      _
    $region27: #{_lambda_.1} parent=1 // pred_check_branch
      %39 = sbr.rel (0) target = $region29
    $region28: #{_lambda_.1} parent=1 // pred_region
      _
    $region29: #{_lambda_.1} parent=1 // pred_fallthru
      _
    // Predicated region
    $region30: #{_lambda_.1} parent=1 // pred_check
      _
    $region31: #{_lambda_.1} parent=1 // pred_check_branch
      %41 = sbr.rel (0) target = $region33
    $region32: #{_lambda_.1} parent=1 // pred_region
      _
    $region33: #{_lambda_.1} parent=1 // pred_fallthru
      _
    // Predicated region
    $region34: #{_lambda_.1} parent=1 // pred_check
      _
    $region35: #{_lambda_.1} parent=1 // pred_check_branch
      %43 = sbr.rel (0) target = $region37
    $region36: #{_lambda_.1} parent=1 // pred_region
      %45 = dma.done [#allocation5], 6144
    $region37: #{_lambda_.1} parent=1 // pred_fallthru
      _
    %v46 = vld [vmem:[%s0] sm:$0xff]
    %v47 = vld [vmem:[%s0 + $0x8] sm:$0xff]
    %48 = vst [vmem:[#allocation2] sm:$0x1] 0.0
    %49 = vst [vmem:[#allocation2 + $0x11] sm:$0x1] 0.0
    %50 = vst [vmem:[#allocation2 + $0x1] sm:$0xff] %v46
    %51 = vst [vmem:[#allocation2 + $0x9] sm:$0xff] %v47
    %v52 = vld [vmem:[#allocation2] sm:$0xff]
    %v53 = vld [vmem:[#allocation2 + $0x8] sm:$0xff]
    %v54 = vld [vmem:[#allocation2 + $0x2] sm:$0xff]
    %v55 = vld [vmem:[#allocation2 + $0xa] sm:$0xff]
    %v56 = vld [vmem:[#allocation4] sm:$0xff]
    %v57 = vld [vmem:[#allocation4 + $0x8] sm:$0xff]
    %v58 = vld [vmem:[#allocation4 + $0x10] sm:$0xff]
    %v59 = vld [vmem:[#allocation4 + $0x18] sm:$0xff]
    %v60 = vld [vmem:[#allocation4 + $0x20] sm:$0xff]
    %v61 = vld [vmem:[#allocation4 + $0x28] sm:$0xff]
    %v62 = vld [vmem:[#allocation4 + $0x30] sm:$0xff]
    %v63 = vld [vmem:[#allocation4 + $0x38] sm:$0xff]
    %v64 = vld [vmem:[#allocation4 + $0x40] sm:$0xff]
    %v65 = vld [vmem:[#allocation4 + $0x48] sm:$0xff]
    %v66 = vld [vmem:[#allocation4 + $0x50] sm:$0xff]
    %v67 = vld [vmem:[#allocation4 + $0x58] sm:$0xff]
    %v68 = vld [vmem:[#allocation4 + $0x60] sm:$0xff]
    %v69 = vld [vmem:[#allocation4 + $0x68] sm:$0xff]
    %v70 = vld [vmem:[#allocation4 + $0x70] sm:$0xff]
    %v71 = vld [vmem:[#allocation4 + $0x78] sm:$0xff]
    %v72 = vld [vmem:[#allocation4 + $0x80] sm:$0xff]
    %v73 = vld [vmem:[#allocation4 + $0x88] sm:$0xff]
    %v74 = vld [vmem:[#allocation4 + $0x90] sm:$0xff]
    %v75 = vld [vmem:[#allocation4 + $0x98] sm:$0xff]
    %v76 = vld [vmem:[#allocation4 + $0xa0] sm:$0xff]
    %v77 = vld [vmem:[#allocation4 + $0xa8] sm:$0xff]
    %v78 = vld [vmem:[#allocation4 + $0xb0] sm:$0xff]
    %v79 = vld [vmem:[#allocation4 + $0xb8] sm:$0xff]
    %v80 = vld [vmem:[#allocation4 + $0xc0] sm:$0xff]
    %v81 = vld [vmem:[#allocation4 + $0xc8] sm:$0xff]
    %v82 = vld [vmem:[#allocation4 + $0xd0] sm:$0xff]
    %v83 = vld [vmem:[#allocation4 + $0xd8] sm:$0xff]
    %v84 = vld [vmem:[#allocation4 + $0xe0] sm:$0xff]
    %v85 = vld [vmem:[#allocation4 + $0xe8] sm:$0xff]
    %v86 = vld [vmem:[#allocation4 + $0xf0] sm:$0xff]
    %v87 = vld [vmem:[#allocation4 + $0xf8] sm:$0xff]
    %v88 = vld [vmem:[#allocation4 + $0x100] sm:$0xff]
    %v89 = vld [vmem:[#allocation4 + $0x108] sm:$0xff]
    %v90 = vld [vmem:[#allocation4 + $0x110] sm:$0xff]
    %v91 = vld [vmem:[#allocation4 + $0x118] sm:$0xff]
    %v92 = vld [vmem:[#allocation4 + $0x120] sm:$0xff]
    %v93 = vld [vmem:[#allocation4 + $0x128] sm:$0xff]
    %v94 = vld [vmem:[#allocation4 + $0x130] sm:$0xff]
    %v95 = vld [vmem:[#allocation4 + $0x138] sm:$0xff]
    %v96 = vld [vmem:[#allocation4 + $0x140] sm:$0xff]
    %v97 = vld [vmem:[#allocation4 + $0x148] sm:$0xff]
    %v98 = vld [vmem:[#allocation4 + $0x150] sm:$0xff]
    %v99 = vld [vmem:[#allocation4 + $0x158] sm:$0xff]
    %v100 = vld [vmem:[#allocation4 + $0x160] sm:$0xff]
    %v101 = vld [vmem:[#allocation4 + $0x168] sm:$0xff]
    %v102 = vld [vmem:[#allocation4 + $0x170] sm:$0xff]
    %v103 = vld [vmem:[#allocation4 + $0x178] sm:$0xff]
    %104 = vmatpush.msra.mxu0 %v71
    %105 = vmatpush.msra.mxu0 %v70
    %106 = vmatpush.msra.mxu0 %v69
    %107 = vmatpush.msra.mxu0 %v68
    %108 = vmatpush.msra.mxu0 %v67
    %109 = vmatpush.msra.mxu0 %v66
    %110 = vmatpush.msra.mxu0 %v65
    %111 = vmatpush.msra.mxu0 %v64
    %112 = vmatpush.msra.mxu0 %v63
    %113 = vmatpush.msra.mxu0 %v62
    %114 = vmatpush.msra.mxu0 %v61
    %115 = vmatpush.msra.mxu0 %v60
    %116 = vmatpush.msra.mxu0 %v59
    %117 = vmatpush.msra.mxu0 %v58
    %118 = vmatpush.msra.mxu0 %v57
    %119 = vmatpush.msra.mxu0 %v56
    %120 = vmatmul.f32.gmra.mxu0 %v52
    %v121 = vpop.f32.mrf.mxu0
    %v122 = vadd.f32 0.0, %v121
    %123 = vmatmul.f32.gmra.mxu0 %v53
    %v124 = vpop.f32.mrf.mxu0
    %v125 = vadd.f32 0.0, %v124
    %126 = vdwg.mxu0
    %127 = vmatpush.msra.mxu0 %v87
    %128 = vmatpush.msra.mxu0 %v86
    %129 = vmatpush.msra.mxu0 %v85
    %130 = vmatpush.msra.mxu0 %v84
    %131 = vmatpush.msra.mxu0 %v83
    %132 = vmatpush.msra.mxu0 %v82
    %133 = vmatpush.msra.mxu0 %v81
    %134 = vmatpush.msra.mxu0 %v80
    %135 = vmatpush.msra.mxu0 %v79
    %136 = vmatpush.msra.mxu0 %v78
    %137 = vmatpush.msra.mxu0 %v77
    %138 = vmatpush.msra.mxu0 %v76
    %139 = vmatpush.msra.mxu0 %v75
    %140 = vmatpush.msra.mxu0 %v74
    %141 = vmatpush.msra.mxu0 %v73
    %142 = vmatpush.msra.mxu0 %v72
    %143 = vmatmul.f32.gmra.mxu0 %v46
    %v144 = vpop.f32.mrf.mxu0
    %v145 = vadd.f32 %v122, %v144
    %146 = vmatmul.f32.gmra.mxu0 %v47
    %v147 = vpop.f32.mrf.mxu0
    %v148 = vadd.f32 %v125, %v147
    %149 = vdwg.mxu0
    %150 = vmatpush.msra.mxu0 %v103
    %151 = vmatpush.msra.mxu0 %v102
    %152 = vmatpush.msra.mxu0 %v101
    %153 = vmatpush.msra.mxu0 %v100
    %154 = vmatpush.msra.mxu0 %v99
    %155 = vmatpush.msra.mxu0 %v98
    %156 = vmatpush.msra.mxu0 %v97
    %157 = vmatpush.msra.mxu0 %v96
    %158 = vmatpush.msra.mxu0 %v95
    %159 = vmatpush.msra.mxu0 %v94
    %160 = vmatpush.msra.mxu0 %v93
    %161 = vmatpush.msra.mxu0 %v92
    %162 = vmatpush.msra.mxu0 %v91
    %163 = vmatpush.msra.mxu0 %v90
    %164 = vmatpush.msra.mxu0 %v89
    %165 = vmatpush.msra.mxu0 %v88
    %166 = vmatmul.f32.gmra.mxu0 %v54
    %v167 = vpop.f32.mrf.mxu0
    %v168 = vadd.f32 %v145, %v167
    %169 = vmatmul.f32.gmra.mxu0 %v55
    %v170 = vpop.f32.mrf.mxu0
    %v171 = vadd.f32 %v148, %v170
    %172 = vdwg.mxu0
    %v173 = vadd.f32 %v168, %v171
    %v174 = vrot.slane %v173, 4
    %v175 = vadd.f32 %v173, %v174
    %v176 = vrot.slane %v175, 2
    %v177 = vadd.f32 %v175, %v176
    %v178 = vrot.slane %v177, 1
    %v179 = vadd.f32 %v177, %v178
    %v180 = vmul.f32 %v168, %v168
    %v181 = vmul.f32 %v171, %v171
    %v182 = vadd.f32 %v180, %v181
    %v183 = vrot.slane %v182, 4
    %v184 = vadd.f32 %v182, %v183
    %v185 = vrot.slane %v184, 2
    %v186 = vadd.f32 %v184, %v185
    %v187 = vrot.slane %v186, 1
    %v188 = vadd.f32 %v186, %v187
    %vm189 = vcmask 1040384
    %v190 = vsel %vm189, %v179, %v188
    %191 = vrot.lane.b32.xlu0 %v190, 4
    %v192 = vpop.permute.xlu0 %191
    %v193 = vadd.f32 %v190, %v192
    %194 = vrot.lane.b32.xlu0 %v193, 8
    %v195 = vpop.permute.xlu0 %194
    %v196 = vadd.f32 %v193, %v195
    %197 = vrot.lane.b32.xlu0 %v196, 16
    %v198 = vpop.permute.xlu0 %197
    %v199 = vadd.f32 %v196, %v198
    %200 = vrot.lane.b32.xlu0 %v199, 32
    %v201 = vpop.permute.xlu0 %200
    %v202 = vadd.f32 %v199, %v201
    %203 = vrot.lane.b32.xlu0 %v202, 64
    %v204 = vpop.permute.xlu0 %203
    %v205 = vadd.f32 %v202, %v204
    %v206 = vmul.f32 %v205, 0.001953125
    %v207 = vmul.f32 %v206, %v206
    %v209 = vrot.slane %v207, 7
    %v211 = vsub.f32 %v206, %v209
    %v212 = vperm.slane %v206, 0
    %v213 = vsub.f32 %v168, %v212
    %v214 = vsub.f32 %v171, %v212
    %v215 = vadd.f32 %v211, 1e-05
    %v216 = vrsqrt.pop %v215
    %v217 = vmul.f32 %v216, %v215
    %v218 = vmul.f32 %v217, %v216
    %v219 = vmul.f32 0.5, %v218
    %v220 = vsub.f32 1.5, %v219
    %v221 = vmul.f32 %v216, %v220
    %vm222 = vweird.f32 %v215
    %vm223 = vweird.f32 %v216
    %vm224 = vmor %vm222, %vm223
    %v225 = vsel %vm224, %v216, %v221
    %v226 = vperm.slane %v225, 1
    %v227 = vmul.f32 %v213, %v226
    %v228 = vmul.f32 %v214, %v226
    %v229 = vld [vmem:[%s2] sm:$0x1]
    %v231 = vperm.slane %v229, 0
    %v233 = vmul.f32 %v227, %v231
    %v234 = vmul.f32 %v228, %v231
    %v235 = vld [vmem:[%s3] sm:$0x1]
    %v237 = vperm.slane %v235, 0
    %v239 = vadd.f32 %v233, %v237
    %v240 = vadd.f32 %v234, %v237
    %s241 = sld [smem:[#allocation3]]
    %vm242 = vcmp.gt.f32.partialorder %v239, 0.0
    %vm243 = vcmp.gt.f32.partialorder %v240, 0.0
    %v244 = vstv %s241
    %v245 = vmul.f32 %v244, %v239
    %v246 = vmul.f32 %v244, %v240
    %v247 = vsel %vm242, %v239, %v245
    %v248 = vsel %vm243, %v240, %v246
    %249 = vst [vmem:[#allocation2 + $0x1] sm:$0xff] %v247
    %250 = vst [vmem:[#allocation2 + $0x9] sm:$0xff] %v248
    %v251 = vld [vmem:[#allocation2] sm:$0xff]
    %v252 = vld [vmem:[#allocation2 + $0x8] sm:$0xff]
    %v253 = vld [vmem:[#allocation2 + $0x2] sm:$0xff]
    %v254 = vld [vmem:[#allocation2 + $0xa] sm:$0xff]
    %v255 = vld [vmem:[%s4] sm:$0xff]
    %v256 = vld [vmem:[%s4 + $0x8] sm:$0xff]
    %v257 = vld [vmem:[%s4 + $0x10] sm:$0xff]
    %v258 = vld [vmem:[%s4 + $0x18] sm:$0xff]
    %v259 = vld [vmem:[%s4 + $0x20] sm:$0xff]
    %v260 = vld [vmem:[%s4 + $0x28] sm:$0xff]
    %v261 = vld [vmem:[%s4 + $0x30] sm:$0xff]
    %v262 = vld [vmem:[%s4 + $0x38] sm:$0xff]
    %v263 = vld [vmem:[%s4 + $0x40] sm:$0xff]
    %v264 = vld [vmem:[%s4 + $0x48] sm:$0xff]
    %v265 = vld [vmem:[%s4 + $0x50] sm:$0xff]
    %v266 = vld [vmem:[%s4 + $0x58] sm:$0xff]
    %v267 = vld [vmem:[%s4 + $0x60] sm:$0xff]
    %v268 = vld [vmem:[%s4 + $0x68] sm:$0xff]
    %v269 = vld [vmem:[%s4 + $0x70] sm:$0xff]
    %v270 = vld [vmem:[%s4 + $0x78] sm:$0xff]
    %v271 = vld [vmem:[%s4 + $0x80] sm:$0xff]
    %v272 = vld [vmem:[%s4 + $0x88] sm:$0xff]
    %v273 = vld [vmem:[%s4 + $0x90] sm:$0xff]
    %v274 = vld [vmem:[%s4 + $0x98] sm:$0xff]
    %v275 = vld [vmem:[%s4 + $0xa0] sm:$0xff]
    %v276 = vld [vmem:[%s4 + $0xa8] sm:$0xff]
    %v277 = vld [vmem:[%s4 + $0xb0] sm:$0xff]
    %v278 = vld [vmem:[%s4 + $0xb8] sm:$0xff]
    %v279 = vld [vmem:[%s4 + $0xc0] sm:$0xff]
    %v280 = vld [vmem:[%s4 + $0xc8] sm:$0xff]
    %v281 = vld [vmem:[%s4 + $0xd0] sm:$0xff]
    %v282 = vld [vmem:[%s4 + $0xd8] sm:$0xff]
    %v283 = vld [vmem:[%s4 + $0xe0] sm:$0xff]
    %v284 = vld [vmem:[%s4 + $0xe8] sm:$0xff]
    %v285 = vld [vmem:[%s4 + $0xf0] sm:$0xff]
    %v286 = vld [vmem:[%s4 + $0xf8] sm:$0xff]
    %v287 = vld [vmem:[%s4 + $0x100] sm:$0xff]
    %v288 = vld [vmem:[%s4 + $0x108] sm:$0xff]
    %v289 = vld [vmem:[%s4 + $0x110] sm:$0xff]
    %v290 = vld [vmem:[%s4 + $0x118] sm:$0xff]
    %v291 = vld [vmem:[%s4 + $0x120] sm:$0xff]
    %v292 = vld [vmem:[%s4 + $0x128] sm:$0xff]
    %v293 = vld [vmem:[%s4 + $0x130] sm:$0xff]
    %v294 = vld [vmem:[%s4 + $0x138] sm:$0xff]
    %v295 = vld [vmem:[%s4 + $0x140] sm:$0xff]
    %v296 = vld [vmem:[%s4 + $0x148] sm:$0xff]
    %v297 = vld [vmem:[%s4 + $0x150] sm:$0xff]
    %v298 = vld [vmem:[%s4 + $0x158] sm:$0xff]
    %v299 = vld [vmem:[%s4 + $0x160] sm:$0xff]
    %v300 = vld [vmem:[%s4 + $0x168] sm:$0xff]
    %v301 = vld [vmem:[%s4 + $0x170] sm:$0xff]
    %v302 = vld [vmem:[%s4 + $0x178] sm:$0xff]
    %303 = vmatpush.msra.mxu0 %v270
    %304 = vmatpush.msra.mxu0 %v269
    %305 = vmatpush.msra.mxu0 %v268
    %306 = vmatpush.msra.mxu0 %v267
    %307 = vmatpush.msra.mxu0 %v266
    %308 = vmatpush.msra.mxu0 %v265
    %309 = vmatpush.msra.mxu0 %v264
    %310 = vmatpush.msra.mxu0 %v263
    %311 = vmatpush.msra.mxu0 %v262
    %312 = vmatpush.msra.mxu0 %v261
    %313 = vmatpush.msra.mxu0 %v260
    %314 = vmatpush.msra.mxu0 %v259
    %315 = vmatpush.msra.mxu0 %v258
    %316 = vmatpush.msra.mxu0 %v257
    %317 = vmatpush.msra.mxu0 %v256
    %318 = vmatpush.msra.mxu0 %v255
    %319 = vmatmul.f32.gmra.mxu0 %v251
    %v320 = vpop.f32.mrf.mxu0
    %v321 = vadd.f32 0.0, %v320
    %322 = vmatmul.f32.gmra.mxu0 %v252
    %v323 = vpop.f32.mrf.mxu0
    %v324 = vadd.f32 0.0, %v323
    %325 = vdwg.mxu0
    %326 = vmatpush.msra.mxu0 %v286
    %327 = vmatpush.msra.mxu0 %v285
    %328 = vmatpush.msra.mxu0 %v284
    %329 = vmatpush.msra.mxu0 %v283
    %330 = vmatpush.msra.mxu0 %v282
    %331 = vmatpush.msra.mxu0 %v281
    %332 = vmatpush.msra.mxu0 %v280
    %333 = vmatpush.msra.mxu0 %v279
    %334 = vmatpush.msra.mxu0 %v278
    %335 = vmatpush.msra.mxu0 %v277
    %336 = vmatpush.msra.mxu0 %v276
    %337 = vmatpush.msra.mxu0 %v275
    %338 = vmatpush.msra.mxu0 %v274
    %339 = vmatpush.msra.mxu0 %v273
    %340 = vmatpush.msra.mxu0 %v272
    %341 = vmatpush.msra.mxu0 %v271
    %342 = vmatmul.f32.gmra.mxu0 %v247
    %v343 = vpop.f32.mrf.mxu0
    %v344 = vadd.f32 %v321, %v343
    %345 = vmatmul.f32.gmra.mxu0 %v248
    %v346 = vpop.f32.mrf.mxu0
    %v347 = vadd.f32 %v324, %v346
    %348 = vdwg.mxu0
    %349 = vmatpush.msra.mxu0 %v302
    %350 = vmatpush.msra.mxu0 %v301
    %351 = vmatpush.msra.mxu0 %v300
    %352 = vmatpush.msra.mxu0 %v299
    %353 = vmatpush.msra.mxu0 %v298
    %354 = vmatpush.msra.mxu0 %v297
    %355 = vmatpush.msra.mxu0 %v296
    %356 = vmatpush.msra.mxu0 %v295
    %357 = vmatpush.msra.mxu0 %v294
    %358 = vmatpush.msra.mxu0 %v293
    %359 = vmatpush.msra.mxu0 %v292
    %360 = vmatpush.msra.mxu0 %v291
    %361 = vmatpush.msra.mxu0 %v290
    %362 = vmatpush.msra.mxu0 %v289
    %363 = vmatpush.msra.mxu0 %v288
    %364 = vmatpush.msra.mxu0 %v287
    %365 = vmatmul.f32.gmra.mxu0 %v253
    %v366 = vpop.f32.mrf.mxu0
    %v367 = vadd.f32 %v344, %v366
    %368 = vmatmul.f32.gmra.mxu0 %v254
    %v369 = vpop.f32.mrf.mxu0
    %v370 = vadd.f32 %v347, %v369
    %371 = vdwg.mxu0
    %v372 = vadd.f32 %v367, %v370
    %v373 = vrot.slane %v372, 4
    %v374 = vadd.f32 %v372, %v373
    %v375 = vrot.slane %v374, 2
    %v376 = vadd.f32 %v374, %v375
    %v377 = vrot.slane %v376, 1
    %v378 = vadd.f32 %v376, %v377
    %v379 = vmul.f32 %v367, %v367
    %v380 = vmul.f32 %v370, %v370
    %v381 = vadd.f32 %v379, %v380
    %v382 = vrot.slane %v381, 4
    %v383 = vadd.f32 %v381, %v382
    %v384 = vrot.slane %v383, 2
    %v385 = vadd.f32 %v383, %v384
    %v386 = vrot.slane %v385, 1
    %v387 = vadd.f32 %v385, %v386
    %v388 = vsel %vm189, %v378, %v387
    %389 = vrot.lane.b32.xlu0 %v388, 4
    %v390 = vpop.permute.xlu0 %389
    %v391 = vadd.f32 %v388, %v390
    %392 = vrot.lane.b32.xlu0 %v391, 8
    %v393 = vpop.permute.xlu0 %392
    %v394 = vadd.f32 %v391, %v393
    %395 = vrot.lane.b32.xlu0 %v394, 16
    %v396 = vpop.permute.xlu0 %395
    %v397 = vadd.f32 %v394, %v396
    %398 = vrot.lane.b32.xlu0 %v397, 32
    %v399 = vpop.permute.xlu0 %398
    %v400 = vadd.f32 %v397, %v399
    %401 = vrot.lane.b32.xlu0 %v400, 64
    %v402 = vpop.permute.xlu0 %401
    %v403 = vadd.f32 %v400, %v402
    %v404 = vmul.f32 %v403, 0.001953125
    %v405 = vmul.f32 %v404, %v404
    %v407 = vrot.slane %v405, 7
    %v409 = vsub.f32 %v404, %v407
    %v410 = vperm.slane %v404, 0
    %v411 = vsub.f32 %v367, %v410
    %v412 = vsub.f32 %v370, %v410
    %v413 = vadd.f32 %v409, 1e-05
    %v414 = vrsqrt.pop %v413
    %v415 = vmul.f32 %v414, %v413
    %v416 = vmul.f32 %v415, %v414
    %v417 = vmul.f32 0.5, %v416
    %v418 = vsub.f32 1.5, %v417
    %v419 = vmul.f32 %v414, %v418
    %vm420 = vweird.f32 %v413
    %vm421 = vweird.f32 %v414
    %vm422 = vmor %vm420, %vm421
    %v423 = vsel %vm422, %v414, %v419
    %v424 = vperm.slane %v423, 1
    %v425 = vmul.f32 %v411, %v424
    %v426 = vmul.f32 %v412, %v424
    %v427 = vld [vmem:[%s5] sm:$0x1]
    %v429 = vperm.slane %v427, 0
    %v431 = vmul.f32 %v425, %v429
    %v432 = vmul.f32 %v426, %v429
    %v433 = vld [vmem:[%s6] sm:$0x1]
    %v435 = vperm.slane %v433, 0
    %v437 = vadd.f32 %v431, %v435
    %v438 = vadd.f32 %v432, %v435
    %v439 = vadd.f32 %v46, %v437
    %v440 = vadd.f32 %v47, %v438
    %441 = vst [vmem:[%s8] sm:$0xff] %v439
    %442 = vst [vmem:[%s8 + $0x8] sm:$0xff] %v440
    // Predicated region
    $region38: #{_lambda_.1} parent=1 // pred_check
      _
    $region39: #{_lambda_.1} parent=1 // pred_check_branch
      %444 = sbr.rel (0) target = $region41
    $region40: #{_lambda_.1} parent=1 // pred_region
      _
    $region41: #{_lambda_.1} parent=1 // pred_fallthru
      _
    // Predicated region
    $region42: #{_lambda_.1} parent=1 // pred_check
      _
    $region43: #{_lambda_.1} parent=1 // pred_check_branch
      %446 = sbr.rel (0) target = $region45
    $region44: #{_lambda_.1} parent=1 // pred_region
      _
    $region45: #{_lambda_.1} parent=1 // pred_fallthru
      _
    %447 = vsyncpa [#allocation5], 1

</llo_original>
